<compile_context>
chip_gen: v5e
topology: v5e:2x2
jax: 0.10.0
libtpu: 0.0.40
codegen_flags: <defaults>
</compile_context>

<pallas_src>
import functools

import jax
import jax.numpy as jnp
from jax.experimental import pallas as pl
from jax.experimental.pallas import tpu as pltpu

_LANE = 128
_SUBLANE = 8


def _round_up(x, m):
    return ((x + m - 1) // m) * m


def _embed_kernel(x_ref, w_ref, b_ref, o_ref, *, nonlinear, norm):
    # x: (tm, D_in), w: (D_in, D_pad), b: (1, D_pad), o: (tm, D_pad)
    y = jnp.dot(x_ref[...], w_ref[...], preferred_element_type=jnp.float32)
    y = y + b_ref[...]

    if nonlinear:
        y = jnp.maximum(y, 0.0)

    if norm:
        # L2 normalization over the feature (lane) dim.
        # Reference: y / max(||y||, 1e-10).  Clamping the squared sum at 1e-20
        # and using rsqrt (EUP slot, leaves the VALU free) is equivalent.
        sq = jnp.sum(y * y, axis=-1, keepdims=True)
        y = y * jax.lax.rsqrt(jnp.maximum(sq, 1e-20))

    # TODO(synk): training-mode dropout mask (pltpu.prng_random_bits) not
    # implemented; dropout is identity in eval mode.
    o_ref[...] = y.astype(o_ref.dtype)


def _pick_block_rows(d_in, d_pad, budget_bytes=24 * 1024 * 1024):
    """Rows per batch tile so (double-buffered) tiles + weight fit the budget."""
    resident = 4 * (2 * d_in * d_pad + 2 * d_pad)      # weight + bias (x2 bufs)
    per_row = 4 * 2 * (d_in + d_pad)                   # x tile + out tile (x2 bufs)
    avail = max(budget_bytes - resident, per_row * _SUBLANE)
    tm = avail // per_row
    tm = max(_SUBLANE, min(1024, (tm // _SUBLANE) * _SUBLANE))
    return tm


def encoder_forward(fts, weight, bias, *, nonlinear=True, norm=True,
                    block_rows=None, matmul_dtype=None):
    """Encoder forward (is_embed=True path).

    fts:    (batch, ..., D_in)   float32
    weight: (D_in, D_out)        float32
    bias:   (D_out,)             float32
    returns (batch, ..., D_out)
    """
    # TODO(synk): is_embed=False config branch (pure relu/l2norm passthrough)
    # is not implemented in this kernel.
    lead = fts.shape[:-1]
    d_in = fts.shape[-1]
    d_out = weight.shape[1]

    x = fts.reshape(-1, d_in)
    b_rows = x.shape[0]

    # Lane-dense padding of the output feature dim (zeros -> math unchanged).
    d_pad = _round_up(d_out, _LANE)
    bias2d = bias.reshape(1, d_out)
    if d_pad != d_out:
        w = jnp.pad(weight, ((0, 0), (0, d_pad - d_out)))
        bias2d = jnp.pad(bias2d, ((0, 0), (0, d_pad - d_out)))
    else:
        w = weight

    if matmul_dtype is not None:
        # Narrow MXU inputs, f32 accumulation + f32 epilogue.
        x_mm = x.astype(matmul_dtype)
        w = w.astype(matmul_dtype)
    else:
        x_mm = x

    kernel = functools.partial(_embed_kernel, nonlinear=nonlinear, norm=norm)
    out_dtype = fts.dtype

    small_bytes = 4 * (b_rows * d_in + d_in * d_pad + d_pad + b_rows * d_pad)
    if block_rows is None and small_bytes <= 4 * 1024 * 1024:
        # ---- tiny-shape path: single invocation, whole arrays in VMEM ----
        out = pl.pallas_call(
            kernel,
            out_shape=jax.ShapeDtypeStruct((b_rows, d_pad), out_dtype),
            in_specs=[
                pl.BlockSpec(memory_space=pltpu.MemorySpace.VMEM),
                pl.BlockSpec(memory_space=pltpu.MemorySpace.VMEM),
                pl.BlockSpec(memory_space=pltpu.MemorySpace.VMEM),
            ],
            out_specs=pl.BlockSpec(memory_space=pltpu.MemorySpace.VMEM),
        )(x_mm, w, bias2d)
    else:
        # ---- production path: tile the batch dim, keep weight/bias resident ----
        # TODO(synk): very large D_in would additionally want a K-reduction grid
        # axis with a VMEM f32 accumulator (P3 pattern); not needed here.
        tm = block_rows if block_rows is not None else _pick_block_rows(d_in, d_pad)
        tm = min(tm, _round_up(b_rows, _SUBLANE))
        tm = max(_SUBLANE, (tm // _SUBLANE) * _SUBLANE)
        grid = (pl.cdiv(b_rows, tm),)

        out = pl.pallas_call(
            kernel,
            out_shape=jax.ShapeDtypeStruct((b_rows, d_pad), out_dtype),
            grid=grid,
            in_specs=[
                pl.BlockSpec((tm, d_in), lambda i: (i, 0)),
                pl.BlockSpec((d_in, d_pad), lambda i: (0, 0)),
                pl.BlockSpec((1, d_pad), lambda i: (0, 0)),
            ],
            out_specs=pl.BlockSpec((tm, d_pad), lambda i: (i, 0)),
            compiler_params=pltpu.CompilerParams(
                dimension_semantics=("parallel",),
                vmem_limit_bytes=32 * 1024 * 1024,
            ),
        )(x_mm, w, bias2d)

    out = out[:, :d_out]
    return out.reshape(*lead, d_out)


def reference_forward(fts, weight, bias, *, nonlinear=True, norm=True):
    y = fts @ weight + bias
    if nonlinear:
        y = jnp.maximum(y, 0.0)
    if norm:
        nrm = jnp.sqrt(jnp.sum(y * y, axis=-1, keepdims=True))
        y = y / jnp.maximum(nrm, 1e-10)
    return y


if __name__ == "__main__":
    key = jax.random.PRNGKey(0)

    # ---- Case 1: toy config (dim_fts=[32], dim_embed=32) -> tiny VMEM path ----
    batch, dim_in, dim_embed = 8, 32, 32
    k_x, k_w, k_b, key = jax.random.split(key, 4)
    bound = 1.0 / (dim_in ** 0.5)
    fts = jax.random.normal(k_x, (batch, dim_in), dtype=jnp.float32)
    weight = jax.random.uniform(k_w, (dim_in, dim_embed),
                                minval=-bound, maxval=bound, dtype=jnp.float32)
    bias = jax.random.uniform(k_b, (dim_embed,),
                              minval=-bound, maxval=bound, dtype=jnp.float32)

    out = encoder_forward(fts, weight, bias)
    out = jax.block_until_ready(out)
    ref = reference_forward(fts, weight, bias)
    assert out.shape == (batch, dim_embed)
    assert jnp.allclose(out, ref, atol=1e-5, rtol=1e-4), "case1 mismatch vs reference"

    # ---- Case 2: batch-tiled grid path (forced small tile to exercise it) ----
    batch2, dim_in2, dim_embed2 = 64, 40, 48
    k_x2, k_w2, k_b2, key = jax.random.split(key, 4)
    bound2 = 1.0 / (dim_in2 ** 0.5)
    fts2 = jax.random.normal(k_x2, (batch2, dim_in2), dtype=jnp.float32)
    weight2 = jax.random.uniform(k_w2, (dim_in2, dim_embed2),
                                 minval=-bound2, maxval=bound2, dtype=jnp.float32)
    bias2 = jax.random.uniform(k_b2, (dim_embed2,),
                               minval=-bound2, maxval=bound2, dtype=jnp.float32)

    out2 = encoder_forward(fts2, weight2, bias2, block_rows=16)
    out2 = jax.block_until_ready(out2)
    ref2 = reference_forward(fts2, weight2, bias2)
    assert out2.shape == (batch2, dim_embed2)
    assert jnp.allclose(out2, ref2, atol=1e-5, rtol=1e-4), "case2 mismatch vs reference"

    # ---- Case 3: leading dims (batch, seq, D_in) + relu-only config ----
    batch3, seq3, dim_in3, dim_embed3 = 2, 8, 32, 32
    k_x3, k_w3, k_b3, key = jax.random.split(key, 4)
    bound3 = 1.0 / (dim_in3 ** 0.5)
    fts3 = jax.random.normal(k_x3, (batch3, seq3, dim_in3), dtype=jnp.float32)
    weight3 = jax.random.uniform(k_w3, (dim_in3, dim_embed3),
                                 minval=-bound3, maxval=bound3, dtype=jnp.float32)
    bias3 = jax.random.uniform(k_b3, (dim_embed3,),
                               minval=-bound3, maxval=bound3, dtype=jnp.float32)

    out3 = encoder_forward(fts3, weight3, bias3, nonlinear=True, norm=False)
    out3 = jax.block_until_ready(out3)
    ref3 = reference_forward(fts3, weight3, bias3, nonlinear=True, norm=False)
    assert out3.shape == (batch3, seq3, dim_embed3)
    assert jnp.allclose(out3, ref3, atol=1e-5, rtol=1e-4), "case3 mismatch vs reference"

    print("KERNEL_OK")
</pallas_src>

<mosaic_0001>
module attributes {stable_mosaic.version = 11 : i64} {
  func.func @_embed_kernel(%arg0: memref<8x32xf32, #tpu.memory_space<vmem>>, %arg1: memref<32x128xf32, #tpu.memory_space<vmem>>, %arg2: memref<1x128xf32, #tpu.memory_space<vmem>>, %arg3: memref<8x128xf32, #tpu.memory_space<vmem>>) attributes {dimension_semantics = [], scalar_prefetch = 0 : i64, scratch_operands = 0 : i64, tpu.core_type = #tpu.core_type<tc>} {
    %c0 = arith.constant 0 : index
    %c0_0 = arith.constant 0 : index
    %0 = vector.load %arg0[%c0, %c0_0] : memref<8x32xf32, #tpu.memory_space<vmem>>, vector<8x32xf32>
    %c0_1 = arith.constant 0 : index
    %c0_2 = arith.constant 0 : index
    %1 = vector.load %arg1[%c0_1, %c0_2] : memref<32x128xf32, #tpu.memory_space<vmem>>, vector<32x128xf32>
    %cst = arith.constant dense<0.000000e+00> : vector<8x128xf32>
    %2 = tpu.matmul %0, %1, %cst {dimension_numbers = #tpu.dot_dimension_numbers<[1], [0], [0], [1], [0, 0, 1, 1], [], []>} : vector<8x32xf32>, vector<32x128xf32>, vector<8x128xf32> -> vector<8x128xf32>
    %c0_3 = arith.constant 0 : index
    %c0_4 = arith.constant 0 : index
    %3 = vector.load %arg2[%c0_3, %c0_4] : memref<1x128xf32, #tpu.memory_space<vmem>>, vector<1x128xf32>
    %4 = vector.broadcast %3 : vector<1x128xf32> to vector<8x128xf32>
    %5 = arith.addf %2, %4 : vector<8x128xf32>
    %cst_5 = arith.constant 0.000000e+00 : f32
    %6 = vector.broadcast %cst_5 : f32 to vector<8x128xf32>
    %7 = arith.maximumf %5, %6 : vector<8x128xf32>
    %8 = arith.mulf %7, %7 : vector<8x128xf32>
    %cst_6 = arith.constant dense<0.000000e+00> : vector<8xf32>
    %9 = vector.multi_reduction <add>, %8, %cst_6 [1] : vector<8x128xf32> to vector<8xf32>
    %10 = vector.shape_cast %9 : vector<8xf32> to vector<8x1xf32>
    %cst_7 = arith.constant 9.99999968E-21 : f32
    %11 = vector.broadcast %cst_7 : f32 to vector<8x1xf32>
    %12 = arith.maximumf %10, %11 : vector<8x1xf32>
    %13 = math.rsqrt %12 : vector<8x1xf32>
    %14 = vector.broadcast %13 : vector<8x1xf32> to vector<8x128xf32>
    %15 = arith.mulf %7, %14 : vector<8x128xf32>
    %c0_8 = arith.constant 0 : index
    %c0_9 = arith.constant 0 : index
    %16 = vector.load %arg3[%c0_8, %c0_9] : memref<8x128xf32, #tpu.memory_space<vmem>>, vector<8x128xf32>
    tpu.vector_store %arg3[%c0_8, %c0_9], %15 {strides = array<i32>} : memref<8x128xf32, #tpu.memory_space<vmem>>, vector<8x128xf32>,
    return
  }
}

</mosaic_0001>

<llo_original>
// kernel: tpu_custom_call.1
$region0: #{tpu_custom_call.1}
  #allocation0 [shape = 'u32[]', space=smem, size = 0x4, offset = 0x4, fixed_abs, tag = 'smem constant byte address 0x4 - core index']
  #allocation1 [shape = 'u32[72,128]{1,0:T(1,128)}', space=vmem, size = 0x9000, scoped, tag = 'internal scratch']
  %s0 = inlined_call_operand.hbm [shape: f32[8,32], index: 0, kind: input, shape index: {}]
  %s1 = inlined_call_operand.hbm [shape: f32[32,128], index: 1, kind: input, shape index: {}]
  %s2 = inlined_call_operand.vmem [shape: f32[1,128], index: 2, kind: input, shape index: {}]
  %s3 = inlined_call_operand.hbm [shape: f32[8,128], index: 3, kind: output, shape index: {}]
  %s4 = sld [smem:[#allocation0]]
  $region30: #{tpu_custom_call.1} parent=0
    _
  %s6 = ssub.s32 1, %s4
  %s7 = scalar_select 0, %s6, %s4
  $region1: #{tpu_custom_call.1} parent=0
    #allocation2 [shape = 'u8[4096]{0}', space=vmem, size = 0x1000, scoped, tag = 'input window, operand 0, single buffered']
    #allocation3 [shape = 's32[1]{0}', space=sflag, size = 0x4, scoped, tag = 'scoped memory for tpu_custom_call.1']
    #allocation4 [shape = 's32[1]{0}', space=sflag, size = 0x4, scoped, tag = 'scoped memory for tpu_custom_call.1']
    #allocation5 [shape = 'u8[16384]{0}', space=vmem, size = 0x4000, scoped, tag = 'input window, operand 1, single buffered']
    #allocation6 [shape = 's32[1]{0}', space=sflag, size = 0x4, scoped, tag = 'scoped memory for tpu_custom_call.1']
    #allocation7 [shape = 'u8[4096]{0}', space=vmem, size = 0x1000, scoped, tag = 'output window, operand 0, single buffered']
    %8 = vsyncpa [#allocation3], 0
    %9 = vsyncpa [#allocation6], 0
    %10 = vsyncpa [#allocation4], 0
    // Predicated region
    $region2: #{tpu_custom_call.1} parent=1 // pred_check
      _
    $region3: #{tpu_custom_call.1} parent=1 // pred_check_branch
      %12 = sbr.rel (0) target = $region5
    $region4: #{tpu_custom_call.1} parent=1 // pred_region
      %14 = vsyncadd [#allocation3], 0
      %s16 = sshll.u32 %s0, 4
      %s17 = int_to_ptr.hbm [resolvable:$true] %s16
      %s18 = sshll.u32 [#allocation2], 4
      %s19 = int_to_ptr.vmem [resolvable:$true] %s18
      %21 = dma.hbm_to_vmem [thread:$0]  %s17, 128, %s19, [#allocation3]
    $region5: #{tpu_custom_call.1} parent=1 // pred_fallthru
      _
    // Predicated region
    $region6: #{tpu_custom_call.1} parent=1 // pred_check
      _
    $region7: #{tpu_custom_call.1} parent=1 // pred_check_branch
      %23 = sbr.rel (0) target = $region9
    $region8: #{tpu_custom_call.1} parent=1 // pred_region
      %25 = vsyncadd [#allocation6], 0
      %s26 = sshll.u32 %s1, 4
      %s27 = int_to_ptr.hbm [resolvable:$true] %s26
      %s28 = sshll.u32 [#allocation5], 4
      %s29 = int_to_ptr.vmem [resolvable:$true] %s28
      %34 = dma.hbm_to_vmem [thread:$0]  %s27, 512, %s29, [#allocation6], 128, 128, 8
    $region9: #{tpu_custom_call.1} parent=1 // pred_fallthru
      _
    // Predicated region
    $region10: #{tpu_custom_call.1} parent=1 // pred_check
      _
    $region11: #{tpu_custom_call.1} parent=1 // pred_check_branch
      %36 = sbr.rel (0) target = $region13
    $region12: #{tpu_custom_call.1} parent=1 // pred_region
      _
    $region13: #{tpu_custom_call.1} parent=1 // pred_fallthru
      _
    // Predicated region
    $region14: #{tpu_custom_call.1} parent=1 // pred_check
      _
    $region15: #{tpu_custom_call.1} parent=1 // pred_check_branch
      %38 = sbr.rel (0) target = $region17
    $region16: #{tpu_custom_call.1} parent=1 // pred_region
      %40 = dma.done [#allocation3], 128
    $region17: #{tpu_custom_call.1} parent=1 // pred_fallthru
      _
    // Predicated region
    $region18: #{tpu_custom_call.1} parent=1 // pred_check
      _
    $region19: #{tpu_custom_call.1} parent=1 // pred_check_branch
      %42 = sbr.rel (0) target = $region21
    $region20: #{tpu_custom_call.1} parent=1 // pred_region
      %44 = dma.done [#allocation6], 512
    $region21: #{tpu_custom_call.1} parent=1 // pred_fallthru
      _
    %v45 = vld [vmem:[#allocation2] sm:$0xff]
    %v46 = vld [vmem:[#allocation5] sm:$0xff]
    %v47 = vld [vmem:[#allocation5 + $0x8] sm:$0xff]
    %v48 = vld [vmem:[#allocation5 + $0x10] sm:$0xff]
    %v49 = vld [vmem:[#allocation5 + $0x18] sm:$0xff]
    %v50 = vld [vmem:[%s2] sm:$0x1]
    %v52 = vperm.slane %v50, 0
    %vm54 = vcmask 261120
    %v56 = vsel %vm54, %v45, 0
    %58 = vmatpush.msra.mxu0 0.0
    %59 = vmatpush.msra.mxu0 0.0
    %60 = vmatpush.msra.mxu0 0.0
    %61 = vmatpush.msra.mxu0 0.0
    %62 = vmatpush.msra.mxu0 0.0
    %63 = vmatpush.msra.mxu0 0.0
    %64 = vmatpush.msra.mxu0 0.0
    %65 = vmatpush.msra.mxu0 0.0
    %66 = vmatpush.msra.mxu0 0.0
    %67 = vmatpush.msra.mxu0 0.0
    %68 = vmatpush.msra.mxu0 0.0
    %69 = vmatpush.msra.mxu0 0.0
    %70 = vmatpush.msra.mxu0 %v49
    %71 = vmatpush.msra.mxu0 %v48
    %72 = vmatpush.msra.mxu0 %v47
    %73 = vmatpush.msra.mxu0 %v46
    %74 = vmatmul.f32.gmra.mxu0 %v56
    %v75 = vpop.f32.mrf.mxu0
    %v76 = vadd.f32 %v52, %v75
    %77 = vdwg.mxu0
    %v78 = vmax.f32 %v76, 0.0
    %v79 = vmul.f32 %v78, %v78
    %80 = vadd.xlane.f32.xlu0 %v79
    %v81 = vpop.xlane.xlu0 %80
    %v82 = vmax.f32 %v81, 1e-20
    %v83 = vrsqrt.pop %v82
    %v84 = vmul.f32 %v83, %v82
    %v85 = vmul.f32 %v84, %v83
    %v86 = vmul.f32 0.5, %v85
    %v87 = vsub.f32 1.5, %v86
    %v88 = vmul.f32 %v83, %v87
    %vm89 = vweird.f32 %v82
    %vm90 = vweird.f32 %v83
    %vm91 = vmor %vm89, %vm90
    %v92 = vsel %vm91, %v83, %v88
    %v93 = vmul.f32 %v78, %v92
    %94 = vst [vmem:[#allocation7] sm:$0xff] %v93
    // Predicated region
    $region22: #{tpu_custom_call.1} parent=1 // pred_check
      _
    $region23: #{tpu_custom_call.1} parent=1 // pred_check_branch
      %96 = sbr.rel (0) target = $region25
    $region24: #{tpu_custom_call.1} parent=1 // pred_region
      %98 = vsyncadd [#allocation4], 0
      %s100 = sshll.u32 [#allocation7], 4
      %s101 = int_to_ptr.vmem [resolvable:$true] %s100
      %s102 = sshll.u32 %s3, 4
      %s103 = int_to_ptr.hbm [resolvable:$true] %s102
      %105 = dma.vmem_to_hbm [thread:$0]  %s101, 128, %s103, [#allocation4]
    $region25: #{tpu_custom_call.1} parent=1 // pred_fallthru
      _
    // Predicated region
    $region26: #{tpu_custom_call.1} parent=1 // pred_check
      _
    $region27: #{tpu_custom_call.1} parent=1 // pred_check_branch
      %107 = sbr.rel (0) target = $region29
    $region28: #{tpu_custom_call.1} parent=1 // pred_region
      %109 = dma.done [#allocation4], 128
    $region29: #{tpu_custom_call.1} parent=1 // pred_fallthru
      _
    %110 = vsyncpa [#allocation3], 1
    %111 = vsyncpa [#allocation6], 1
    %112 = vsyncpa [#allocation4], 1

</llo_original>
